<compile_context>
chip_gen: v5e
topology: v5e:2x2
jax: 0.10.0
libtpu: 0.0.40
codegen_flags: <defaults>
</compile_context>

<pallas_src>
import numpy as np
import jax
import jax.numpy as jnp
from jax.experimental import pallas as pl
from jax.experimental.pallas import tpu as pltpu

_LANE = 128
_TILE_B_MAX = 2048  # 2048 lanes * 64 sublanes * 4 B ≈ 512 KiB output tile


def _gfp_kernel(x_ref, w_ref, o_ref):
    # x_ref: (1, TILE_B) f32   -- time steps, batch on lanes
    # w_ref: (half, 1)  f32    -- fixed Gaussian weights (unscaled)
    # o_ref: (2, half, TILE_B) f32 -- slab 0 = sin, slab 1 = cos
    x = x_ref[...]                          # (1, TILE_B)
    w = w_ref[...]                          # (half, 1)
    # Same rounding order as the reference: (x*W) first, then the 2*pi factor.
    # (x*2 is exact in fp32, so grouping the 2 with pi is bit-equivalent.)
    x_proj = (w * x) * (2.0 * np.pi)        # outer product -> (half, TILE_B)
    o_ref[0, :, :] = jnp.sin(x_proj)        # full-slab, lane-dense store
    o_ref[1, :, :] = jnp.cos(x_proj)        # full-slab, lane-dense store


def gaussian_fourier_projection(x, W):
    """x: (B,) float32 time steps; W: (embed_dim//2,) fixed Gaussian weights.

    Returns (B, embed_dim) float32 = [sin(2*pi*x*W), cos(2*pi*x*W)].
    """
    B = int(x.shape[0])
    half = int(W.shape[0])
    embed_dim = 2 * half

    # Pad B up to a lane multiple, then to a tile multiple; tile over B.
    b_pad = ((B + _LANE - 1) // _LANE) * _LANE
    tile_b = min(b_pad, _TILE_B_MAX)
    b_pad = ((b_pad + tile_b - 1) // tile_b) * tile_b
    grid = (b_pad // tile_b,)

    # Batch on lanes; padded tail is zeros (sliced away below).
    x_lanes = jnp.pad(x.astype(jnp.float32), (0, b_pad - B)).reshape(1, b_pad)
    w_col = W.astype(jnp.float32).reshape(half, 1)

    out_t = pl.pallas_call(
        _gfp_kernel,
        out_shape=jax.ShapeDtypeStruct((2, half, b_pad), jnp.float32),
        grid=grid,
        in_specs=[
            pl.BlockSpec((1, tile_b), lambda i: (0, i)),
            pl.BlockSpec((half, 1), lambda i: (0, 0)),
        ],
        out_specs=pl.BlockSpec((2, half, tile_b), lambda i: (0, 0, i)),
        compiler_params=pltpu.CompilerParams(
            dimension_semantics=("parallel",)
        ),
    )(x_lanes, w_col)

    # (2, half, b_pad) -> (embed_dim, b_pad): contiguous (free) reshape;
    # rows [0, half) are sin, rows [half, embed_dim) are cos.
    out_t = out_t.reshape(embed_dim, b_pad)
    # Layout plumbing back to (B, embed_dim); matches torch.cat([sin, cos], -1).
    return out_t[:, :B].T


def gaussian_fourier_projection_ref(x, W):
    x_proj = x[:, None] * W[None, :] * 2.0 * np.pi
    return jnp.concatenate([jnp.sin(x_proj), jnp.cos(x_proj)], axis=-1)


if __name__ == "__main__":
    # Module config: embed_dim=64, scale=30.0 ; batch of 8 time steps.
    embed_dim = 64
    scale = 30.0
    batch = 8

    key = jax.random.PRNGKey(0)
    k_w, k_x, k_x2 = jax.random.split(key, 3)

    # Deterministic "parameter" init matching torch.randn(embed_dim//2) * scale
    W = jax.random.normal(k_w, (embed_dim // 2,), dtype=jnp.float32) * scale
    # Time steps in (0, 1), like diffusion training time samples.
    x = jax.random.uniform(k_x, (batch,), dtype=jnp.float32)

    out = gaussian_fourier_projection(x, W)
    out = jax.block_until_ready(out)
    ref = gaussian_fourier_projection_ref(x, W)
    # fp32 trig with O(100)-rad arguments: allow for range-reduction impl
    # differences between the Pallas and XLA sin/cos lowerings.
    np.testing.assert_allclose(np.asarray(out), np.asarray(ref),
                               rtol=1e-5, atol=1e-4)
    assert out.shape == (batch, embed_dim)

    # Second check: batch not a multiple of the lane width (exercises padding).
    batch2 = 300
    x2 = jax.random.uniform(k_x2, (batch2,), dtype=jnp.float32)
    out2 = jax.block_until_ready(gaussian_fourier_projection(x2, W))
    ref2 = gaussian_fourier_projection_ref(x2, W)
    np.testing.assert_allclose(np.asarray(out2), np.asarray(ref2),
                               rtol=1e-5, atol=1e-4)
    assert out2.shape == (batch2, embed_dim)

    print("KERNEL_OK")
</pallas_src>

<mosaic_0001>
module attributes {stable_mosaic.version = 11 : i64} {
  func.func @_gfp_kernel(%arg0: i32, %arg1: memref<1x128xf32, #tpu.memory_space<vmem>>, %arg2: memref<32x1xf32, #tpu.memory_space<vmem>>, %arg3: memref<2x32x128xf32, #tpu.memory_space<vmem>>) attributes {dimension_semantics = [#tpu.dimension_semantics<parallel>], iteration_bounds = array<i64: 1>, scalar_prefetch = 0 : i64, scratch_operands = 0 : i64, tpu.core_type = #tpu.core_type<tc>, window_params = [{transform_indices = @transform_0, window_bounds = array<i64: 1, 128>}, {pipeline_mode = #tpu.pipeline_mode<synchronous>, transform_indices = @transform_1, window_bounds = array<i64: 32, 1>}, {transform_indices = @transform_2, window_bounds = array<i64: 2, 32, 128>}]} {
    %c0 = arith.constant 0 : index
    %c0_0 = arith.constant 0 : index
    %0 = vector.load %arg1[%c0, %c0_0] : memref<1x128xf32, #tpu.memory_space<vmem>>, vector<1x128xf32>
    %c0_1 = arith.constant 0 : index
    %c0_2 = arith.constant 0 : index
    %1 = vector.load %arg2[%c0_1, %c0_2] : memref<32x1xf32, #tpu.memory_space<vmem>>, vector<32x1xf32>
    %2 = vector.broadcast %1 : vector<32x1xf32> to vector<32x128xf32>
    %3 = vector.broadcast %0 : vector<1x128xf32> to vector<32x128xf32>
    %4 = arith.mulf %2, %3 : vector<32x128xf32>
    %cst = arith.constant 6.28318548 : f32
    %5 = vector.broadcast %cst : f32 to vector<32x128xf32>
    %6 = arith.mulf %4, %5 : vector<32x128xf32>
    %7 = math.sin %6 : vector<32x128xf32>
    %c0_3 = arith.constant 0 : index
    %c0_4 = arith.constant 0 : index
    %c0_5 = arith.constant 0 : index
    %8 = vector.load %arg3[%c0_3, %c0_4, %c0_5] : memref<2x32x128xf32, #tpu.memory_space<vmem>>, vector<1x32x128xf32>
    %9 = vector.shape_cast %8 : vector<1x32x128xf32> to vector<32x128xf32>
    %10 = vector.shape_cast %7 : vector<32x128xf32> to vector<1x32x128xf32>
    tpu.vector_store %arg3[%c0_3, %c0_4, %c0_5], %10 {strides = array<i32>} : memref<2x32x128xf32, #tpu.memory_space<vmem>>, vector<1x32x128xf32>,
    %11 = math.cos %6 : vector<32x128xf32>
    %c1 = arith.constant 1 : index
    %c0_6 = arith.constant 0 : index
    %c0_7 = arith.constant 0 : index
    %12 = vector.load %arg3[%c1, %c0_6, %c0_7] : memref<2x32x128xf32, #tpu.memory_space<vmem>>, vector<1x32x128xf32>
    %13 = vector.shape_cast %12 : vector<1x32x128xf32> to vector<32x128xf32>
    %14 = vector.shape_cast %11 : vector<32x128xf32> to vector<1x32x128xf32>
    tpu.vector_store %arg3[%c1, %c0_6, %c0_7], %14 {strides = array<i32>} : memref<2x32x128xf32, #tpu.memory_space<vmem>>, vector<1x32x128xf32>,
    return
  }
  func.func @transform_0(%arg0: i32) -> (i32, i32) {
    %c0_i32 = arith.constant 0 : i32
    %c0_i32_0 = arith.constant 0 : i32
    return %c0_i32, %arg0 : i32, i32
  }
  func.func @transform_1(%arg0: i32) -> (i32, i32) {
    %c0_i32 = arith.constant 0 : i32
    %c0_i32_0 = arith.constant 0 : i32
    %c0_i32_1 = arith.constant 0 : i32
    return %c0_i32, %c0_i32_0 : i32, i32
  }
  func.func @transform_2(%arg0: i32) -> (i32, i32, i32) {
    %c0_i32 = arith.constant 0 : i32
    %c0_i32_0 = arith.constant 0 : i32
    %c0_i32_1 = arith.constant 0 : i32
    return %c0_i32, %c0_i32_0, %arg0 : i32, i32, i32
  }
}

</mosaic_0001>

<llo_original>
// kernel: tpu_custom_call.1
$region0: #{tpu_custom_call.1}
  #allocation0 [shape = 'u32[]', space=smem, size = 0x4, offset = 0x4, fixed_abs, tag = 'smem constant byte address 0x4 - core index']
  #allocation1 [shape = 'u32[72,128]{1,0:T(1,128)}', space=vmem, size = 0x9000, scoped, tag = 'internal scratch']
  %s0 = inlined_call_operand.vmem [shape: f32[1,128], index: 0, kind: input, shape index: {}]
  %s1 = inlined_call_operand.vmem [shape: f32[32,1], index: 1, kind: input, shape index: {}]
  %s2 = inlined_call_operand.hbm [shape: f32[2,32,128], index: 2, kind: output, shape index: {}]
  %s3 = sld [smem:[#allocation0]]
  $region18: #{tpu_custom_call.1} parent=0
    _
  %s5 = ssub.s32 1, %s3
  %s6 = scalar_select 0, %s5, %s3
  $region1: #{tpu_custom_call.1} parent=0
    #allocation2 [shape = 'u8[32768]{0}', space=vmem, size = 0x8000, scoped, tag = 'output window, operand 0, single buffered']
    #allocation3 [shape = 's32[1]{0}', space=sflag, size = 0x4, scoped, tag = 'scoped memory for tpu_custom_call.1']
    %7 = vsyncpa [#allocation3], 0
    // Predicated region
    $region2: #{tpu_custom_call.1} parent=1 // pred_check
      _
    $region3: #{tpu_custom_call.1} parent=1 // pred_check_branch
      %9 = sbr.rel (0) target = $region5
    $region4: #{tpu_custom_call.1} parent=1 // pred_region
      _
    $region5: #{tpu_custom_call.1} parent=1 // pred_fallthru
      _
    // Predicated region
    $region6: #{tpu_custom_call.1} parent=1 // pred_check
      _
    $region7: #{tpu_custom_call.1} parent=1 // pred_check_branch
      %11 = sbr.rel (0) target = $region9
    $region8: #{tpu_custom_call.1} parent=1 // pred_region
      _
    $region9: #{tpu_custom_call.1} parent=1 // pred_fallthru
      _
    %v12 = vld [vmem:[%s0] sm:$0x1]
    %v13 = vld [vmem:[%s1] sm:$0xff]
    %v14 = vld [vmem:[%s1 + $0x8] sm:$0xff]
    %v15 = vld [vmem:[%s1 + $0x10] sm:$0xff]
    %v16 = vld [vmem:[%s1 + $0x18] sm:$0xff]
    %18 = vset.pattern.permute.xlu0 0
    %19 = vperm.xlu0 %18, %v13
    %v20 = vpop.permute.xlu0 %19
    %23 = vset.pattern.permute.xlu0 0
    %24 = vperm.xlu0 %23, %v14
    %v25 = vpop.permute.xlu0 %24
    %28 = vset.pattern.permute.xlu0 0
    %29 = vperm.xlu0 %28, %v15
    %v30 = vpop.permute.xlu0 %29
    %33 = vset.pattern.permute.xlu0 0
    %34 = vperm.xlu0 %33, %v16
    %v35 = vpop.permute.xlu0 %34
    %v38 = vperm.slane %v12, 0
    %v40 = vmul.f32 %v20, %v38
    %v41 = vmul.f32 %v25, %v38
    %v42 = vmul.f32 %v30, %v38
    %v43 = vmul.f32 %v35, %v38
    %v44 = vmul.f32 %v40, 6.2831855
    %v45 = vmul.f32 %v41, 6.2831855
    %v46 = vmul.f32 %v42, 6.2831855
    %v47 = vmul.f32 %v43, 6.2831855
    %v48 = vand.u32 2147483647, %v44
    %vm49 = vcmp.le.f32.partialorder %v48, 0.7853982
    %vm50 = vcmp.lt.s32.totalorder %v44, 0
    %v51 = vand.u32 %v44, 2139095040
    %v52 = vshrl.u32 %v51, 23
    %v53 = vsub.s32 %v52, 127
    %v54 = vand.u32 2147483647, %v44
    %v55 = vand.u32 %v54, 8388607
    %v56 = vor.u32 %v55, 8388608
    %v57 = vsub.s32 0, %v56
    %v58 = vadd.s32 %v53, 1
    %vm59 = vcmp.gt.s32.totalorder %v58, 0
    %v60 = vsel %vm59, %v58, 0
    %v61 = vshrl.u32 %v60, 5
    %v62 = vand.u32 %v60, 31
    %v63 = vsub.s32 32, %v62
    %v64 = vshrl.u32 683565275, %v63
    %v65 = vshll.u32 683565275, %v62
    %v66 = vshrl.u32 2475754826, %v63
    %v67 = vor.u32 %v65, %v66
    %v68 = vshll.u32 2475754826, %v62
    %v69 = vshrl.u32 2131351028, %v63
    %v70 = vor.u32 %v68, %v69
    %v71 = vshll.u32 2131351028, %v62
    %v72 = vshrl.u32 2102212464, %v63
    %v73 = vor.u32 %v71, %v72
    %v74 = vshll.u32 2102212464, %v62
    %v75 = vshrl.u32 920167782, %v63
    %v76 = vor.u32 %v74, %v75
    %v77 = vshll.u32 920167782, %v62
    %v78 = vshrl.u32 1326507024, %v63
    %v79 = vor.u32 %v77, %v78
    %vm80 = vcmp.lt.s32.totalorder %v61, 1
    %vm81 = vcmp.lt.s32.totalorder %v61, 2
    %vm82 = vcmp.lt.s32.totalorder %v61, 3
    %vm83 = vcmp.lt.s32.totalorder %v61, 4
    %v84 = vsel %vm80, %v64, %v67
    %v85 = vsel %vm83, %v73, 2102212464
    %v86 = vsel %vm82, %v70, %v85
    %v87 = vsel %vm81, %v84, %v86
    %v88 = vsel %vm80, %v67, %v70
    %v89 = vsel %vm83, %v76, 920167782
    %v90 = vsel %vm82, %v73, %v89
    %v91 = vsel %vm81, %v88, %v90
    %v92 = vsel %vm80, %v70, %v73
    %v93 = vsel %vm83, %v79, 1326507024
    %v94 = vsel %vm82, %v76, %v93
    %v95 = vsel %vm81, %v92, %v94
    %v96 = vshll.u32 %v56, 8
    %v97 = vand.u32 %v96, 65535
    %v98 = vshrl.u32 %v96, 16
    %v99 = vand.u32 %v95, 65535
    %v100 = vshrl.u32 %v95, 16
    %v101 = vmul.u32 %v97, %v99
    %v102 = vmul.u32 %v97, %v100
    %v103 = vmul.u32 %v98, %v99
    %v104 = vmul.u32 %v98, %v100
    %v105 = vshll.u32 %v102, 16
    %v106 = vshrl.u32 %v102, 16
    %v107 = vshll.u32 %v103, 16
    %v108 = vshrl.u32 %v103, 16
    %vm109 = vc.u32 %v101, %v105
    %v110 = vsel %vm109, 1, 0
    %v111 = vadd.s32 %v101, %v105
    %v112 = vadd.s32 %v104, %v110
    %vm113 = vc.u32 %v111, %v107
    %v114 = vsel %vm113, 1, 0
    %v115 = vadd.s32 %v111, %v107
    %v116 = vadd.s32 %v112, %v114
    %v117 = vadd.s32 %v116, %v106
    %v118 = vadd.s32 %v117, %v108
    %v119 = vand.u32 %v96, 65535
    %v120 = vshrl.u32 %v96, 16
    %v121 = vand.u32 %v91, 65535
    %v122 = vshrl.u32 %v91, 16
    %v123 = vmul.u32 %v119, %v121
    %v124 = vmul.u32 %v119, %v122
    %v125 = vmul.u32 %v120, %v121
    %v126 = vmul.u32 %v120, %v122
    %v127 = vshll.u32 %v124, 16
    %v128 = vshrl.u32 %v124, 16
    %v129 = vshll.u32 %v125, 16
    %v130 = vshrl.u32 %v125, 16
    %vm131 = vc.u32 %v123, %v127
    %v132 = vsel %vm131, 1, 0
    %v133 = vadd.s32 %v123, %v127
    %v134 = vadd.s32 %v126, %v132
    %vm135 = vc.u32 %v133, %v129
    %v136 = vsel %vm135, 1, 0
    %v137 = vadd.s32 %v133, %v129
    %v138 = vadd.s32 %v134, %v136
    %v139 = vadd.s32 %v138, %v128
    %v140 = vadd.s32 %v139, %v130
    %v141 = vmul.u32 %v96, %v87
    %v142 = vadd.s32 %v118, %v137
    %vm143 = vc.u32 %v118, %v137
    %v144 = vadd.s32 %v140, 1
    %v145 = vsel %vm143, %v144, %v140
    %v146 = vadd.s32 %v141, %v145
    %v147 = vadd.s32 %v146, 536870912
    %v148 = vshrl.u32 %v147, 30
    %v149 = vshll.u32 %v148, 30
    %v150 = vsub.s32 %v146, %v149
    %vm151 = vcmp.lt.s32.totalorder %v150, 0
    %v152 = vsub.s32 0, %v150
    %v153 = vsel %vm151, %v152, %v150
    %v154 = vclz %v153
    %v155 = vsub.s32 %v154, 2
    %vm156 = vcmp.gt.s32.totalorder 0, %v155
    %v157 = vsel %vm156, 0, %v155
    %v158 = vsub.s32 32, %v157
    %v159 = vshll.u32 %v150, %v157
    %v160 = vshrl.u32 %v142, %v158
    %v161 = vor.u32 %v159, %v160
    %v162 = vsub.s32 4294967266, %v157
    %v163 = vadd.s32 %v162, 127
    %v164 = vshll.u32 %v163, 23
    %v165 = vor.u32 4788187, %v164
    %v166 = vand.u32 2147483647, %v165
    %v168 = vcvt.s32.f32 %v161
    %v169 = vmul.f32 %v168, %v166
    %v170 = vxor.u32 %v169, 2147483648
    %v171 = vsel %vm50, %v170, %v169
    %v172 = vsub.s32 4, %v148
    %v173 = vsel %vm50, %v172, %v148
    %v174 = vsel %vm49, %v44, %v171
    %v175 = vsel %vm49, 0, %v173
    %v176 = vmul.f32 %v174, %v174
    %v177 = vmul.f32 %v176, -0.001358992
    %v178 = vadd.f32 %v177, 0.041655596
    %v179 = vmul.f32 %v176, %v178
    %v180 = vadd.f32 %v179, -0.4999988
    %v181 = vmul.f32 %v176, %v180
    %v182 = vadd.f32 1.0, %v181
    %v183 = vmul.f32 %v174, %v174
    %v184 = vmul.f32 %v183, -0.00019511016
    %v185 = vadd.f32 %v184, 0.008332121
    %v186 = vmul.f32 %v183, %v185
    %v187 = vadd.f32 %v186, -0.16666654
    %v188 = vmul.f32 %v183, %v187
    %v189 = vadd.f32 %v188, 1.0
    %v190 = vmul.f32 %v189, %v174
    %vm191 = vweird.f32 %v44
    %v192 = vadd.s32 %v175, 3
    %v193 = vand.u32 %v192, 3
    %vm194 = vcmp.lt.s32.totalorder %v193, 2
    %vm195 = vcmp.eq.s32.totalorder %v193, 0
    %v196 = vxor.u32 %v190, 2147483648
    %v197 = vsel %vm195, %v182, %v196
    %vm198 = vcmp.eq.s32.totalorder %v193, 2
    %v199 = vxor.u32 %v182, 2147483648
    %v200 = vsel %vm198, %v199, %v190
    %v201 = vsel %vm194, %v197, %v200
    %v202 = vsel %vm191, nan, %v201
    %v203 = vand.u32 2147483647, %v45
    %vm204 = vcmp.le.f32.partialorder %v203, 0.7853982
    %vm205 = vcmp.lt.s32.totalorder %v45, 0
    %v206 = vand.u32 %v45, 2139095040
    %v207 = vshrl.u32 %v206, 23
    %v208 = vsub.s32 %v207, 127
    %v209 = vand.u32 2147483647, %v45
    %v210 = vand.u32 %v209, 8388607
    %v211 = vor.u32 %v210, 8388608
    %v212 = vsub.s32 0, %v211
    %v213 = vadd.s32 %v208, 1
    %vm214 = vcmp.gt.s32.totalorder %v213, 0
    %v215 = vsel %vm214, %v213, 0
    %v216 = vshrl.u32 %v215, 5
    %v217 = vand.u32 %v215, 31
    %v218 = vsub.s32 32, %v217
    %v219 = vshrl.u32 683565275, %v218
    %v220 = vshll.u32 683565275, %v217
    %v221 = vshrl.u32 2475754826, %v218
    %v222 = vor.u32 %v220, %v221
    %v223 = vshll.u32 2475754826, %v217
    %v224 = vshrl.u32 2131351028, %v218
    %v225 = vor.u32 %v223, %v224
    %v226 = vshll.u32 2131351028, %v217
    %v227 = vshrl.u32 2102212464, %v218
    %v228 = vor.u32 %v226, %v227
    %v229 = vshll.u32 2102212464, %v217
    %v230 = vshrl.u32 920167782, %v218
    %v231 = vor.u32 %v229, %v230
    %v232 = vshll.u32 920167782, %v217
    %v233 = vshrl.u32 1326507024, %v218
    %v234 = vor.u32 %v232, %v233
    %vm235 = vcmp.lt.s32.totalorder %v216, 1
    %vm236 = vcmp.lt.s32.totalorder %v216, 2
    %vm237 = vcmp.lt.s32.totalorder %v216, 3
    %vm238 = vcmp.lt.s32.totalorder %v216, 4
    %v239 = vsel %vm235, %v219, %v222
    %v240 = vsel %vm238, %v228, 2102212464
    %v241 = vsel %vm237, %v225, %v240
    %v242 = vsel %vm236, %v239, %v241
    %v243 = vsel %vm235, %v222, %v225
    %v244 = vsel %vm238, %v231, 920167782
    %v245 = vsel %vm237, %v228, %v244
    %v246 = vsel %vm236, %v243, %v245
    %v247 = vsel %vm235, %v225, %v228
    %v248 = vsel %vm238, %v234, 1326507024
    %v249 = vsel %vm237, %v231, %v248
    %v250 = vsel %vm236, %v247, %v249
    %v251 = vshll.u32 %v211, 8
    %v252 = vand.u32 %v251, 65535
    %v253 = vshrl.u32 %v251, 16
    %v254 = vand.u32 %v250, 65535
    %v255 = vshrl.u32 %v250, 16
    %v256 = vmul.u32 %v252, %v254
    %v257 = vmul.u32 %v252, %v255
    %v258 = vmul.u32 %v253, %v254
    %v259 = vmul.u32 %v253, %v255
    %v260 = vshll.u32 %v257, 16
    %v261 = vshrl.u32 %v257, 16
    %v262 = vshll.u32 %v258, 16
    %v263 = vshrl.u32 %v258, 16
    %vm264 = vc.u32 %v256, %v260
    %v265 = vsel %vm264, 1, 0
    %v266 = vadd.s32 %v256, %v260
    %v267 = vadd.s32 %v259, %v265
    %vm268 = vc.u32 %v266, %v262
    %v269 = vsel %vm268, 1, 0
    %v270 = vadd.s32 %v266, %v262
    %v271 = vadd.s32 %v267, %v269
    %v272 = vadd.s32 %v271, %v261
    %v273 = vadd.s32 %v272, %v263
    %v274 = vand.u32 %v251, 65535
    %v275 = vshrl.u32 %v251, 16
    %v276 = vand.u32 %v246, 65535
    %v277 = vshrl.u32 %v246, 16
    %v278 = vmul.u32 %v274, %v276
    %v279 = vmul.u32 %v274, %v277
    %v280 = vmul.u32 %v275, %v276
    %v281 = vmul.u32 %v275, %v277
    %v282 = vshll.u32 %v279, 16
    %v283 = vshrl.u32 %v279, 16
    %v284 = vshll.u32 %v280, 16
    %v285 = vshrl.u32 %v280, 16
    %vm286 = vc.u32 %v278, %v282
    %v287 = vsel %vm286, 1, 0
    %v288 = vadd.s32 %v278, %v282
    %v289 = vadd.s32 %v281, %v287
    %vm290 = vc.u32 %v288, %v284
    %v291 = vsel %vm290, 1, 0
    %v292 = vadd.s32 %v288, %v284
    %v293 = vadd.s32 %v289, %v291
    %v294 = vadd.s32 %v293, %v283
    %v295 = vadd.s32 %v294, %v285
    %v296 = vmul.u32 %v251, %v242
    %v297 = vadd.s32 %v273, %v292
    %vm298 = vc.u32 %v273, %v292
    %v299 = vadd.s32 %v295, 1
    %v300 = vsel %vm298, %v299, %v295
    %v301 = vadd.s32 %v296, %v300
    %v302 = vadd.s32 %v301, 536870912
    %v303 = vshrl.u32 %v302, 30
    %v304 = vshll.u32 %v303, 30
    %v305 = vsub.s32 %v301, %v304
    %vm306 = vcmp.lt.s32.totalorder %v305, 0
    %v307 = vsub.s32 0, %v305
    %v308 = vsel %vm306, %v307, %v305
    %v309 = vclz %v308
    %v310 = vsub.s32 %v309, 2
    %vm311 = vcmp.gt.s32.totalorder 0, %v310
    %v312 = vsel %vm311, 0, %v310
    %v313 = vsub.s32 32, %v312
    %v314 = vshll.u32 %v305, %v312
    %v315 = vshrl.u32 %v297, %v313
    %v316 = vor.u32 %v314, %v315
    %v317 = vsub.s32 4294967266, %v312
    %v318 = vadd.s32 %v317, 127
    %v319 = vshll.u32 %v318, 23
    %v320 = vor.u32 4788187, %v319
    %v321 = vand.u32 2147483647, %v320
    %v323 = vcvt.s32.f32 %v316
    %v324 = vmul.f32 %v323, %v321
    %v325 = vxor.u32 %v324, 2147483648
    %v326 = vsel %vm205, %v325, %v324
    %v327 = vsub.s32 4, %v303
    %v328 = vsel %vm205, %v327, %v303
    %v329 = vsel %vm204, %v45, %v326
    %v330 = vsel %vm204, 0, %v328
    %v331 = vmul.f32 %v329, %v329
    %v332 = vmul.f32 %v331, -0.001358992
    %v333 = vadd.f32 %v332, 0.041655596
    %v334 = vmul.f32 %v331, %v333
    %v335 = vadd.f32 %v334, -0.4999988
    %v336 = vmul.f32 %v331, %v335
    %v337 = vadd.f32 1.0, %v336
    %v338 = vmul.f32 %v329, %v329
    %v339 = vmul.f32 %v338, -0.00019511016
    %v340 = vadd.f32 %v339, 0.008332121
    %v341 = vmul.f32 %v338, %v340
    %v342 = vadd.f32 %v341, -0.16666654
    %v343 = vmul.f32 %v338, %v342
    %v344 = vadd.f32 %v343, 1.0
    %v345 = vmul.f32 %v344, %v329
    %vm346 = vweird.f32 %v45
    %v347 = vadd.s32 %v330, 3
    %v348 = vand.u32 %v347, 3
    %vm349 = vcmp.lt.s32.totalorder %v348, 2
    %vm350 = vcmp.eq.s32.totalorder %v348, 0
    %v351 = vxor.u32 %v345, 2147483648
    %v352 = vsel %vm350, %v337, %v351
    %vm353 = vcmp.eq.s32.totalorder %v348, 2
    %v354 = vxor.u32 %v337, 2147483648
    %v355 = vsel %vm353, %v354, %v345
    %v356 = vsel %vm349, %v352, %v355
    %v357 = vsel %vm346, nan, %v356
    %v358 = vand.u32 2147483647, %v46
    %vm359 = vcmp.le.f32.partialorder %v358, 0.7853982
    %vm360 = vcmp.lt.s32.totalorder %v46, 0
    %v361 = vand.u32 %v46, 2139095040
    %v362 = vshrl.u32 %v361, 23
    %v363 = vsub.s32 %v362, 127
    %v364 = vand.u32 2147483647, %v46
    %v365 = vand.u32 %v364, 8388607
    %v366 = vor.u32 %v365, 8388608
    %v367 = vsub.s32 0, %v366
    %v368 = vadd.s32 %v363, 1
    %vm369 = vcmp.gt.s32.totalorder %v368, 0
    %v370 = vsel %vm369, %v368, 0
    %v371 = vshrl.u32 %v370, 5
    %v372 = vand.u32 %v370, 31
    %v373 = vsub.s32 32, %v372
    %v374 = vshrl.u32 683565275, %v373
    %v375 = vshll.u32 683565275, %v372
    %v376 = vshrl.u32 2475754826, %v373
    %v377 = vor.u32 %v375, %v376
    %v378 = vshll.u32 2475754826, %v372
    %v379 = vshrl.u32 2131351028, %v373
    %v380 = vor.u32 %v378, %v379
    %v381 = vshll.u32 2131351028, %v372
    %v382 = vshrl.u32 2102212464, %v373
    %v383 = vor.u32 %v381, %v382
    %v384 = vshll.u32 2102212464, %v372
    %v385 = vshrl.u32 920167782, %v373
    %v386 = vor.u32 %v384, %v385
    %v387 = vshll.u32 920167782, %v372
    %v388 = vshrl.u32 1326507024, %v373
    %v389 = vor.u32 %v387, %v388
    %vm390 = vcmp.lt.s32.totalorder %v371, 1
    %vm391 = vcmp.lt.s32.totalorder %v371, 2
    %vm392 = vcmp.lt.s32.totalorder %v371, 3
    %vm393 = vcmp.lt.s32.totalorder %v371, 4
    %v394 = vsel %vm390, %v374, %v377
    %v395 = vsel %vm393, %v383, 2102212464
    %v396 = vsel %vm392, %v380, %v395
    %v397 = vsel %vm391, %v394, %v396
    %v398 = vsel %vm390, %v377, %v380
    %v399 = vsel %vm393, %v386, 920167782
    %v400 = vsel %vm392, %v383, %v399
    %v401 = vsel %vm391, %v398, %v400
    %v402 = vsel %vm390, %v380, %v383
    %v403 = vsel %vm393, %v389, 1326507024
    %v404 = vsel %vm392, %v386, %v403
    %v405 = vsel %vm391, %v402, %v404
    %v406 = vshll.u32 %v366, 8
    %v407 = vand.u32 %v406, 65535
    %v408 = vshrl.u32 %v406, 16
    %v409 = vand.u32 %v405, 65535
    %v410 = vshrl.u32 %v405, 16
    %v411 = vmul.u32 %v407, %v409
    %v412 = vmul.u32 %v407, %v410
    %v413 = vmul.u32 %v408, %v409
    %v414 = vmul.u32 %v408, %v410
    %v415 = vshll.u32 %v412, 16
    %v416 = vshrl.u32 %v412, 16
    %v417 = vshll.u32 %v413, 16
    %v418 = vshrl.u32 %v413, 16
    %vm419 = vc.u32 %v411, %v415
    %v420 = vsel %vm419, 1, 0
    %v421 = vadd.s32 %v411, %v415
    %v422 = vadd.s32 %v414, %v420
    %vm423 = vc.u32 %v421, %v417
    %v424 = vsel %vm423, 1, 0
    %v425 = vadd.s32 %v421, %v417
    %v426 = vadd.s32 %v422, %v424
    %v427 = vadd.s32 %v426, %v416
    %v428 = vadd.s32 %v427, %v418
    %v429 = vand.u32 %v406, 65535
    %v430 = vshrl.u32 %v406, 16
    %v431 = vand.u32 %v401, 65535
    %v432 = vshrl.u32 %v401, 16
    %v433 = vmul.u32 %v429, %v431
    %v434 = vmul.u32 %v429, %v432
    %v435 = vmul.u32 %v430, %v431
    %v436 = vmul.u32 %v430, %v432
    %v437 = vshll.u32 %v434, 16
    %v438 = vshrl.u32 %v434, 16
    %v439 = vshll.u32 %v435, 16
    %v440 = vshrl.u32 %v435, 16
    %vm441 = vc.u32 %v433, %v437
    %v442 = vsel %vm441, 1, 0
    %v443 = vadd.s32 %v433, %v437
    %v444 = vadd.s32 %v436, %v442
    %vm445 = vc.u32 %v443, %v439
    %v446 = vsel %vm445, 1, 0
    %v447 = vadd.s32 %v443, %v439
    %v448 = vadd.s32 %v444, %v446
    %v449 = vadd.s32 %v448, %v438
    %v450 = vadd.s32 %v449, %v440
    %v451 = vmul.u32 %v406, %v397
    %v452 = vadd.s32 %v428, %v447
    %vm453 = vc.u32 %v428, %v447
    %v454 = vadd.s32 %v450, 1
    %v455 = vsel %vm453, %v454, %v450
    %v456 = vadd.s32 %v451, %v455
    %v457 = vadd.s32 %v456, 536870912
    %v458 = vshrl.u32 %v457, 30
    %v459 = vshll.u32 %v458, 30
    %v460 = vsub.s32 %v456, %v459
    %vm461 = vcmp.lt.s32.totalorder %v460, 0
    %v462 = vsub.s32 0, %v460
    %v463 = vsel %vm461, %v462, %v460
    %v464 = vclz %v463
    %v465 = vsub.s32 %v464, 2
    %vm466 = vcmp.gt.s32.totalorder 0, %v465
    %v467 = vsel %vm466, 0, %v465
    %v468 = vsub.s32 32, %v467
    %v469 = vshll.u32 %v460, %v467
    %v470 = vshrl.u32 %v452, %v468
    %v471 = vor.u32 %v469, %v470
    %v472 = vsub.s32 4294967266, %v467
    %v473 = vadd.s32 %v472, 127
    %v474 = vshll.u32 %v473, 23
    %v475 = vor.u32 4788187, %v474
    %v476 = vand.u32 2147483647, %v475
    %v478 = vcvt.s32.f32 %v471
    %v479 = vmul.f32 %v478, %v476
    %v480 = vxor.u32 %v479, 2147483648
    %v481 = vsel %vm360, %v480, %v479
    %v482 = vsub.s32 4, %v458
    %v483 = vsel %vm360, %v482, %v458
    %v484 = vsel %vm359, %v46, %v481
    %v485 = vsel %vm359, 0, %v483
    %v486 = vmul.f32 %v484, %v484
    %v487 = vmul.f32 %v486, -0.001358992
    %v488 = vadd.f32 %v487, 0.041655596
    %v489 = vmul.f32 %v486, %v488
    %v490 = vadd.f32 %v489, -0.4999988
    %v491 = vmul.f32 %v486, %v490
    %v492 = vadd.f32 1.0, %v491
    %v493 = vmul.f32 %v484, %v484
    %v494 = vmul.f32 %v493, -0.00019511016
    %v495 = vadd.f32 %v494, 0.008332121
    %v496 = vmul.f32 %v493, %v495
    %v497 = vadd.f32 %v496, -0.16666654
    %v498 = vmul.f32 %v493, %v497
    %v499 = vadd.f32 %v498, 1.0
    %v500 = vmul.f32 %v499, %v484
    %vm501 = vweird.f32 %v46
    %v502 = vadd.s32 %v485, 3
    %v503 = vand.u32 %v502, 3
    %vm504 = vcmp.lt.s32.totalorder %v503, 2
    %vm505 = vcmp.eq.s32.totalorder %v503, 0
    %v506 = vxor.u32 %v500, 2147483648
    %v507 = vsel %vm505, %v492, %v506
    %vm508 = vcmp.eq.s32.totalorder %v503, 2
    %v509 = vxor.u32 %v492, 2147483648
    %v510 = vsel %vm508, %v509, %v500
    %v511 = vsel %vm504, %v507, %v510
    %v512 = vsel %vm501, nan, %v511
    %v513 = vand.u32 2147483647, %v47
    %vm514 = vcmp.le.f32.partialorder %v513, 0.7853982
    %vm515 = vcmp.lt.s32.totalorder %v47, 0
    %v516 = vand.u32 %v47, 2139095040
    %v517 = vshrl.u32 %v516, 23
    %v518 = vsub.s32 %v517, 127
    %v519 = vand.u32 2147483647, %v47
    %v520 = vand.u32 %v519, 8388607
    %v521 = vor.u32 %v520, 8388608
    %v522 = vsub.s32 0, %v521
    %v523 = vadd.s32 %v518, 1
    %vm524 = vcmp.gt.s32.totalorder %v523, 0
    %v525 = vsel %vm524, %v523, 0
    %v526 = vshrl.u32 %v525, 5
    %v527 = vand.u32 %v525, 31
    %v528 = vsub.s32 32, %v527
    %v529 = vshrl.u32 683565275, %v528
    %v530 = vshll.u32 683565275, %v527
    %v531 = vshrl.u32 2475754826, %v528
    %v532 = vor.u32 %v530, %v531
    %v533 = vshll.u32 2475754826, %v527
    %v534 = vshrl.u32 2131351028, %v528
    %v535 = vor.u32 %v533, %v534
    %v536 = vshll.u32 2131351028, %v527
    %v537 = vshrl.u32 2102212464, %v528
    %v538 = vor.u32 %v536, %v537
    %v539 = vshll.u32 2102212464, %v527
    %v540 = vshrl.u32 920167782, %v528
    %v541 = vor.u32 %v539, %v540
    %v542 = vshll.u32 920167782, %v527
    %v543 = vshrl.u32 1326507024, %v528
    %v544 = vor.u32 %v542, %v543
    %vm545 = vcmp.lt.s32.totalorder %v526, 1
    %vm546 = vcmp.lt.s32.totalorder %v526, 2
    %vm547 = vcmp.lt.s32.totalorder %v526, 3
    %vm548 = vcmp.lt.s32.totalorder %v526, 4
    %v549 = vsel %vm545, %v529, %v532
    %v550 = vsel %vm548, %v538, 2102212464
    %v551 = vsel %vm547, %v535, %v550
    %v552 = vsel %vm546, %v549, %v551
    %v553 = vsel %vm545, %v532, %v535
    %v554 = vsel %vm548, %v541, 920167782
    %v555 = vsel %vm547, %v538, %v554
    %v556 = vsel %vm546, %v553, %v555
    %v557 = vsel %vm545, %v535, %v538
    %v558 = vsel %vm548, %v544, 1326507024
    %v559 = vsel %vm547, %v541, %v558
    %v560 = vsel %vm546, %v557, %v559
    %v561 = vshll.u32 %v521, 8
    %v562 = vand.u32 %v561, 65535
    %v563 = vshrl.u32 %v561, 16
    %v564 = vand.u32 %v560, 65535
    %v565 = vshrl.u32 %v560, 16
    %v566 = vmul.u32 %v562, %v564
    %v567 = vmul.u32 %v562, %v565
    %v568 = vmul.u32 %v563, %v564
    %v569 = vmul.u32 %v563, %v565
    %v570 = vshll.u32 %v567, 16
    %v571 = vshrl.u32 %v567, 16
    %v572 = vshll.u32 %v568, 16
    %v573 = vshrl.u32 %v568, 16
    %vm574 = vc.u32 %v566, %v570
    %v575 = vsel %vm574, 1, 0
    %v576 = vadd.s32 %v566, %v570
    %v577 = vadd.s32 %v569, %v575
    %vm578 = vc.u32 %v576, %v572
    %v579 = vsel %vm578, 1, 0
    %v580 = vadd.s32 %v576, %v572
    %v581 = vadd.s32 %v577, %v579
    %v582 = vadd.s32 %v581, %v571
    %v583 = vadd.s32 %v582, %v573
    %v584 = vand.u32 %v561, 65535
    %v585 = vshrl.u32 %v561, 16
    %v586 = vand.u32 %v556, 65535
    %v587 = vshrl.u32 %v556, 16
    %v588 = vmul.u32 %v584, %v586
    %v589 = vmul.u32 %v584, %v587
    %v590 = vmul.u32 %v585, %v586
    %v591 = vmul.u32 %v585, %v587
    %v592 = vshll.u32 %v589, 16
    %v593 = vshrl.u32 %v589, 16
    %v594 = vshll.u32 %v590, 16
    %v595 = vshrl.u32 %v590, 16
    %vm596 = vc.u32 %v588, %v592
    %v597 = vsel %vm596, 1, 0
    %v598 = vadd.s32 %v588, %v592
    %v599 = vadd.s32 %v591, %v597
    %vm600 = vc.u32 %v598, %v594
    %v601 = vsel %vm600, 1, 0
    %v602 = vadd.s32 %v598, %v594
    %v603 = vadd.s32 %v599, %v601
    %v604 = vadd.s32 %v603, %v593
    %v605 = vadd.s32 %v604, %v595
    %v606 = vmul.u32 %v561, %v552
    %v607 = vadd.s32 %v583, %v602
    %vm608 = vc.u32 %v583, %v602
    %v609 = vadd.s32 %v605, 1
    %v610 = vsel %vm608, %v609, %v605
    %v611 = vadd.s32 %v606, %v610
    %v612 = vadd.s32 %v611, 536870912
    %v613 = vshrl.u32 %v612, 30
    %v614 = vshll.u32 %v613, 30
    %v615 = vsub.s32 %v611, %v614
    %vm616 = vcmp.lt.s32.totalorder %v615, 0
    %v617 = vsub.s32 0, %v615
    %v618 = vsel %vm616, %v617, %v615
    %v619 = vclz %v618
    %v620 = vsub.s32 %v619, 2
    %vm621 = vcmp.gt.s32.totalorder 0, %v620
    %v622 = vsel %vm621, 0, %v620
    %v623 = vsub.s32 32, %v622
    %v624 = vshll.u32 %v615, %v622
    %v625 = vshrl.u32 %v607, %v623
    %v626 = vor.u32 %v624, %v625
    %v627 = vsub.s32 4294967266, %v622
    %v628 = vadd.s32 %v627, 127
    %v629 = vshll.u32 %v628, 23
    %v630 = vor.u32 4788187, %v629
    %v631 = vand.u32 2147483647, %v630
    %v633 = vcvt.s32.f32 %v626
    %v634 = vmul.f32 %v633, %v631
    %v635 = vxor.u32 %v634, 2147483648
    %v636 = vsel %vm515, %v635, %v634
    %v637 = vsub.s32 4, %v613
    %v638 = vsel %vm515, %v637, %v613
    %v639 = vsel %vm514, %v47, %v636
    %v640 = vsel %vm514, 0, %v638
    %v641 = vmul.f32 %v639, %v639
    %v642 = vmul.f32 %v641, -0.001358992
    %v643 = vadd.f32 %v642, 0.041655596
    %v644 = vmul.f32 %v641, %v643
    %v645 = vadd.f32 %v644, -0.4999988
    %v646 = vmul.f32 %v641, %v645
    %v647 = vadd.f32 1.0, %v646
    %v648 = vmul.f32 %v639, %v639
    %v649 = vmul.f32 %v648, -0.00019511016
    %v650 = vadd.f32 %v649, 0.008332121
    %v651 = vmul.f32 %v648, %v650
    %v652 = vadd.f32 %v651, -0.16666654
    %v653 = vmul.f32 %v648, %v652
    %v654 = vadd.f32 %v653, 1.0
    %v655 = vmul.f32 %v654, %v639
    %vm656 = vweird.f32 %v47
    %v657 = vadd.s32 %v640, 3
    %v658 = vand.u32 %v657, 3
    %vm659 = vcmp.lt.s32.totalorder %v658, 2
    %vm660 = vcmp.eq.s32.totalorder %v658, 0
    %v661 = vxor.u32 %v655, 2147483648
    %v662 = vsel %vm660, %v647, %v661
    %vm663 = vcmp.eq.s32.totalorder %v658, 2
    %v664 = vxor.u32 %v647, 2147483648
    %v665 = vsel %vm663, %v664, %v655
    %v666 = vsel %vm659, %v662, %v665
    %v667 = vsel %vm656, nan, %v666
    %668 = vst [vmem:[#allocation2] sm:$0xff] %v202
    %669 = vst [vmem:[#allocation2 + $0x8] sm:$0xff] %v357
    %670 = vst [vmem:[#allocation2 + $0x10] sm:$0xff] %v512
    %671 = vst [vmem:[#allocation2 + $0x18] sm:$0xff] %v667
    %v672 = vand.u32 2147483647, %v44
    %vm673 = vcmp.le.f32.partialorder %v672, 0.7853982
    %vm674 = vcmp.lt.s32.totalorder %v44, 0
    %v675 = vand.u32 %v44, 2139095040
    %v676 = vshrl.u32 %v675, 23
    %v677 = vsub.s32 %v676, 127
    %v678 = vand.u32 2147483647, %v44
    %v679 = vand.u32 %v678, 8388607
    %v680 = vor.u32 %v679, 8388608
    %v681 = vsub.s32 0, %v680
    %v682 = vadd.s32 %v677, 1
    %vm683 = vcmp.gt.s32.totalorder %v682, 0
    %v684 = vsel %vm683, %v682, 0
    %v685 = vshrl.u32 %v684, 5
    %v686 = vand.u32 %v684, 31
    %v687 = vsub.s32 32, %v686
    %v688 = vshrl.u32 683565275, %v687
    %v689 = vshll.u32 683565275, %v686
    %v690 = vshrl.u32 2475754826, %v687
    %v691 = vor.u32 %v689, %v690
    %v692 = vshll.u32 2475754826, %v686
    %v693 = vshrl.u32 2131351028, %v687
    %v694 = vor.u32 %v692, %v693
    %v695 = vshll.u32 2131351028, %v686
    %v696 = vshrl.u32 2102212464, %v687
    %v697 = vor.u32 %v695, %v696
    %v698 = vshll.u32 2102212464, %v686
    %v699 = vshrl.u32 920167782, %v687
    %v700 = vor.u32 %v698, %v699
    %v701 = vshll.u32 920167782, %v686
    %v702 = vshrl.u32 1326507024, %v687
    %v703 = vor.u32 %v701, %v702
    %vm704 = vcmp.lt.s32.totalorder %v685, 1
    %vm705 = vcmp.lt.s32.totalorder %v685, 2
    %vm706 = vcmp.lt.s32.totalorder %v685, 3
    %vm707 = vcmp.lt.s32.totalorder %v685, 4
    %v708 = vsel %vm704, %v688, %v691
    %v709 = vsel %vm707, %v697, 2102212464
    %v710 = vsel %vm706, %v694, %v709
    %v711 = vsel %vm705, %v708, %v710
    %v712 = vsel %vm704, %v691, %v694
    %v713 = vsel %vm707, %v700, 920167782
    %v714 = vsel %vm706, %v697, %v713
    %v715 = vsel %vm705, %v712, %v714
    %v716 = vsel %vm704, %v694, %v697
    %v717 = vsel %vm707, %v703, 1326507024
    %v718 = vsel %vm706, %v700, %v717
    %v719 = vsel %vm705, %v716, %v718
    %v720 = vshll.u32 %v680, 8
    %v721 = vand.u32 %v720, 65535
    %v722 = vshrl.u32 %v720, 16
    %v723 = vand.u32 %v719, 65535
    %v724 = vshrl.u32 %v719, 16
    %v725 = vmul.u32 %v721, %v723
    %v726 = vmul.u32 %v721, %v724
    %v727 = vmul.u32 %v722, %v723
    %v728 = vmul.u32 %v722, %v724
    %v729 = vshll.u32 %v726, 16
    %v730 = vshrl.u32 %v726, 16
    %v731 = vshll.u32 %v727, 16
    %v732 = vshrl.u32 %v727, 16
    %vm733 = vc.u32 %v725, %v729
    %v734 = vsel %vm733, 1, 0
    %v735 = vadd.s32 %v725, %v729
    %v736 = vadd.s32 %v728, %v734
    %vm737 = vc.u32 %v735, %v731
    %v738 = vsel %vm737, 1, 0
    %v739 = vadd.s32 %v735, %v731
    %v740 = vadd.s32 %v736, %v738
    %v741 = vadd.s32 %v740, %v730
    %v742 = vadd.s32 %v741, %v732
    %v743 = vand.u32 %v720, 65535
    %v744 = vshrl.u32 %v720, 16
    %v745 = vand.u32 %v715, 65535
    %v746 = vshrl.u32 %v715, 16
    %v747 = vmul.u32 %v743, %v745
    %v748 = vmul.u32 %v743, %v746
    %v749 = vmul.u32 %v744, %v745
    %v750 = vmul.u32 %v744, %v746
    %v751 = vshll.u32 %v748, 16
    %v752 = vshrl.u32 %v748, 16
    %v753 = vshll.u32 %v749, 16
    %v754 = vshrl.u32 %v749, 16
    %vm755 = vc.u32 %v747, %v751
    %v756 = vsel %vm755, 1, 0
    %v757 = vadd.s32 %v747, %v751
    %v758 = vadd.s32 %v750, %v756
    %vm759 = vc.u32 %v757, %v753
    %v760 = vsel %vm759, 1, 0
    %v761 = vadd.s32 %v757, %v753
    %v762 = vadd.s32 %v758, %v760
    %v763 = vadd.s32 %v762, %v752
    %v764 = vadd.s32 %v763, %v754
    %v765 = vmul.u32 %v720, %v711
    %v766 = vadd.s32 %v742, %v761
    %vm767 = vc.u32 %v742, %v761
    %v768 = vadd.s32 %v764, 1
    %v769 = vsel %vm767, %v768, %v764
    %v770 = vadd.s32 %v765, %v769
    %v771 = vadd.s32 %v770, 536870912
    %v772 = vshrl.u32 %v771, 30
    %v773 = vshll.u32 %v772, 30
    %v774 = vsub.s32 %v770, %v773
    %vm775 = vcmp.lt.s32.totalorder %v774, 0
    %v776 = vsub.s32 0, %v774
    %v777 = vsel %vm775, %v776, %v774
    %v778 = vclz %v777
    %v779 = vsub.s32 %v778, 2
    %vm780 = vcmp.gt.s32.totalorder 0, %v779
    %v781 = vsel %vm780, 0, %v779
    %v782 = vsub.s32 32, %v781
    %v783 = vshll.u32 %v774, %v781
    %v784 = vshrl.u32 %v766, %v782
    %v785 = vor.u32 %v783, %v784
    %v786 = vsub.s32 4294967266, %v781
    %v787 = vadd.s32 %v786, 127
    %v788 = vshll.u32 %v787, 23
    %v789 = vor.u32 4788187, %v788
    %v790 = vand.u32 2147483647, %v789
    %v792 = vcvt.s32.f32 %v785
    %v793 = vmul.f32 %v792, %v790
    %v794 = vxor.u32 %v793, 2147483648
    %v795 = vsel %vm674, %v794, %v793
    %v796 = vsub.s32 4, %v772
    %v797 = vsel %vm674, %v796, %v772
    %v798 = vsel %vm673, %v44, %v795
    %v799 = vsel %vm673, 0, %v797
    %v800 = vmul.f32 %v798, %v798
    %v801 = vmul.f32 %v800, -0.001358992
    %v802 = vadd.f32 %v801, 0.041655596
    %v803 = vmul.f32 %v800, %v802
    %v804 = vadd.f32 %v803, -0.4999988
    %v805 = vmul.f32 %v800, %v804
    %v806 = vadd.f32 1.0, %v805
    %v807 = vmul.f32 %v798, %v798
    %v808 = vmul.f32 %v807, -0.00019511016
    %v809 = vadd.f32 %v808, 0.008332121
    %v810 = vmul.f32 %v807, %v809
    %v811 = vadd.f32 %v810, -0.16666654
    %v812 = vmul.f32 %v807, %v811
    %v813 = vadd.f32 %v812, 1.0
    %v814 = vmul.f32 %v813, %v798
    %vm815 = vweird.f32 %v44
    %v816 = vand.u32 %v799, 3
    %vm817 = vcmp.lt.s32.totalorder %v816, 2
    %vm818 = vcmp.eq.s32.totalorder %v816, 0
    %v819 = vxor.u32 %v814, 2147483648
    %v820 = vsel %vm818, %v806, %v819
    %vm821 = vcmp.eq.s32.totalorder %v816, 2
    %v822 = vxor.u32 %v806, 2147483648
    %v823 = vsel %vm821, %v822, %v814
    %v824 = vsel %vm817, %v820, %v823
    %v825 = vsel %vm815, nan, %v824
    %v826 = vand.u32 2147483647, %v45
    %vm827 = vcmp.le.f32.partialorder %v826, 0.7853982
    %vm828 = vcmp.lt.s32.totalorder %v45, 0
    %v829 = vand.u32 %v45, 2139095040
    %v830 = vshrl.u32 %v829, 23
    %v831 = vsub.s32 %v830, 127
    %v832 = vand.u32 2147483647, %v45
    %v833 = vand.u32 %v832, 8388607
    %v834 = vor.u32 %v833, 8388608
    %v835 = vsub.s32 0, %v834
    %v836 = vadd.s32 %v831, 1
    %vm837 = vcmp.gt.s32.totalorder %v836, 0
    %v838 = vsel %vm837, %v836, 0
    %v839 = vshrl.u32 %v838, 5
    %v840 = vand.u32 %v838, 31
    %v841 = vsub.s32 32, %v840
    %v842 = vshrl.u32 683565275, %v841
    %v843 = vshll.u32 683565275, %v840
    %v844 = vshrl.u32 2475754826, %v841
    %v845 = vor.u32 %v843, %v844
    %v846 = vshll.u32 2475754826, %v840
    %v847 = vshrl.u32 2131351028, %v841
    %v848 = vor.u32 %v846, %v847
    %v849 = vshll.u32 2131351028, %v840
    %v850 = vshrl.u32 2102212464, %v841
    %v851 = vor.u32 %v849, %v850
    %v852 = vshll.u32 2102212464, %v840
    %v853 = vshrl.u32 920167782, %v841
    %v854 = vor.u32 %v852, %v853
    %v855 = vshll.u32 920167782, %v840
    %v856 = vshrl.u32 1326507024, %v841
    %v857 = vor.u32 %v855, %v856
    %vm858 = vcmp.lt.s32.totalorder %v839, 1
    %vm859 = vcmp.lt.s32.totalorder %v839, 2
    %vm860 = vcmp.lt.s32.totalorder %v839, 3
    %vm861 = vcmp.lt.s32.totalorder %v839, 4
    %v862 = vsel %vm858, %v842, %v845
    %v863 = vsel %vm861, %v851, 2102212464
    %v864 = vsel %vm860, %v848, %v863
    %v865 = vsel %vm859, %v862, %v864
    %v866 = vsel %vm858, %v845, %v848
    %v867 = vsel %vm861, %v854, 920167782
    %v868 = vsel %vm860, %v851, %v867
    %v869 = vsel %vm859, %v866, %v868
    %v870 = vsel %vm858, %v848, %v851
    %v871 = vsel %vm861, %v857, 1326507024
    %v872 = vsel %vm860, %v854, %v871
    %v873 = vsel %vm859, %v870, %v872
    %v874 = vshll.u32 %v834, 8
    %v875 = vand.u32 %v874, 65535
    %v876 = vshrl.u32 %v874, 16
    %v877 = vand.u32 %v873, 65535
    %v878 = vshrl.u32 %v873, 16
    %v879 = vmul.u32 %v875, %v877
    %v880 = vmul.u32 %v875, %v878
    %v881 = vmul.u32 %v876, %v877
    %v882 = vmul.u32 %v876, %v878
    %v883 = vshll.u32 %v880, 16
    %v884 = vshrl.u32 %v880, 16
    %v885 = vshll.u32 %v881, 16
    %v886 = vshrl.u32 %v881, 16
    %vm887 = vc.u32 %v879, %v883
    %v888 = vsel %vm887, 1, 0
    %v889 = vadd.s32 %v879, %v883
    %v890 = vadd.s32 %v882, %v888
    %vm891 = vc.u32 %v889, %v885
    %v892 = vsel %vm891, 1, 0
    %v893 = vadd.s32 %v889, %v885
    %v894 = vadd.s32 %v890, %v892
    %v895 = vadd.s32 %v894, %v884
    %v896 = vadd.s32 %v895, %v886
    %v897 = vand.u32 %v874, 65535
    %v898 = vshrl.u32 %v874, 16
    %v899 = vand.u32 %v869, 65535
    %v900 = vshrl.u32 %v869, 16
    %v901 = vmul.u32 %v897, %v899
    %v902 = vmul.u32 %v897, %v900
    %v903 = vmul.u32 %v898, %v899
    %v904 = vmul.u32 %v898, %v900
    %v905 = vshll.u32 %v902, 16
    %v906 = vshrl.u32 %v902, 16
    %v907 = vshll.u32 %v903, 16
    %v908 = vshrl.u32 %v903, 16
    %vm909 = vc.u32 %v901, %v905
    %v910 = vsel %vm909, 1, 0
    %v911 = vadd.s32 %v901, %v905
    %v912 = vadd.s32 %v904, %v910
    %vm913 = vc.u32 %v911, %v907
    %v914 = vsel %vm913, 1, 0
    %v915 = vadd.s32 %v911, %v907
    %v916 = vadd.s32 %v912, %v914
    %v917 = vadd.s32 %v916, %v906
    %v918 = vadd.s32 %v917, %v908
    %v919 = vmul.u32 %v874, %v865
    %v920 = vadd.s32 %v896, %v915
    %vm921 = vc.u32 %v896, %v915
    %v922 = vadd.s32 %v918, 1
    %v923 = vsel %vm921, %v922, %v918
    %v924 = vadd.s32 %v919, %v923
    %v925 = vadd.s32 %v924, 536870912
    %v926 = vshrl.u32 %v925, 30
    %v927 = vshll.u32 %v926, 30
    %v928 = vsub.s32 %v924, %v927
    %vm929 = vcmp.lt.s32.totalorder %v928, 0
    %v930 = vsub.s32 0, %v928
    %v931 = vsel %vm929, %v930, %v928
    %v932 = vclz %v931
    %v933 = vsub.s32 %v932, 2
    %vm934 = vcmp.gt.s32.totalorder 0, %v933
    %v935 = vsel %vm934, 0, %v933
    %v936 = vsub.s32 32, %v935
    %v937 = vshll.u32 %v928, %v935
    %v938 = vshrl.u32 %v920, %v936
    %v939 = vor.u32 %v937, %v938
    %v940 = vsub.s32 4294967266, %v935
    %v941 = vadd.s32 %v940, 127
    %v942 = vshll.u32 %v941, 23
    %v943 = vor.u32 4788187, %v942
    %v944 = vand.u32 2147483647, %v943
    %v946 = vcvt.s32.f32 %v939
    %v947 = vmul.f32 %v946, %v944
    %v948 = vxor.u32 %v947, 2147483648
    %v949 = vsel %vm828, %v948, %v947
    %v950 = vsub.s32 4, %v926
    %v951 = vsel %vm828, %v950, %v926
    %v952 = vsel %vm827, %v45, %v949
    %v953 = vsel %vm827, 0, %v951
    %v954 = vmul.f32 %v952, %v952
    %v955 = vmul.f32 %v954, -0.001358992
    %v956 = vadd.f32 %v955, 0.041655596
    %v957 = vmul.f32 %v954, %v956
    %v958 = vadd.f32 %v957, -0.4999988
    %v959 = vmul.f32 %v954, %v958
    %v960 = vadd.f32 1.0, %v959
    %v961 = vmul.f32 %v952, %v952
    %v962 = vmul.f32 %v961, -0.00019511016
    %v963 = vadd.f32 %v962, 0.008332121
    %v964 = vmul.f32 %v961, %v963
    %v965 = vadd.f32 %v964, -0.16666654
    %v966 = vmul.f32 %v961, %v965
    %v967 = vadd.f32 %v966, 1.0
    %v968 = vmul.f32 %v967, %v952
    %vm969 = vweird.f32 %v45
    %v970 = vand.u32 %v953, 3
    %vm971 = vcmp.lt.s32.totalorder %v970, 2
    %vm972 = vcmp.eq.s32.totalorder %v970, 0
    %v973 = vxor.u32 %v968, 2147483648
    %v974 = vsel %vm972, %v960, %v973
    %vm975 = vcmp.eq.s32.totalorder %v970, 2
    %v976 = vxor.u32 %v960, 2147483648
    %v977 = vsel %vm975, %v976, %v968
    %v978 = vsel %vm971, %v974, %v977
    %v979 = vsel %vm969, nan, %v978
    %v980 = vand.u32 2147483647, %v46
    %vm981 = vcmp.le.f32.partialorder %v980, 0.7853982
    %vm982 = vcmp.lt.s32.totalorder %v46, 0
    %v983 = vand.u32 %v46, 2139095040
    %v984 = vshrl.u32 %v983, 23
    %v985 = vsub.s32 %v984, 127
    %v986 = vand.u32 2147483647, %v46
    %v987 = vand.u32 %v986, 8388607
    %v988 = vor.u32 %v987, 8388608
    %v989 = vsub.s32 0, %v988
    %v990 = vadd.s32 %v985, 1
    %vm991 = vcmp.gt.s32.totalorder %v990, 0
    %v992 = vsel %vm991, %v990, 0
    %v993 = vshrl.u32 %v992, 5
    %v994 = vand.u32 %v992, 31
    %v995 = vsub.s32 32, %v994
    %v996 = vshrl.u32 683565275, %v995
    %v997 = vshll.u32 683565275, %v994
    %v998 = vshrl.u32 2475754826, %v995
    %v999 = vor.u32 %v997, %v998
    %v1000 = vshll.u32 2475754826, %v994
    %v1001 = vshrl.u32 2131351028, %v995
    %v1002 = vor.u32 %v1000, %v1001
    %v1003 = vshll.u32 2131351028, %v994
    %v1004 = vshrl.u32 2102212464, %v995
    %v1005 = vor.u32 %v1003, %v1004
    %v1006 = vshll.u32 2102212464, %v994
    %v1007 = vshrl.u32 920167782, %v995
    %v1008 = vor.u32 %v1006, %v1007
    %v1009 = vshll.u32 920167782, %v994
    %v1010 = vshrl.u32 1326507024, %v995
    %v1011 = vor.u32 %v1009, %v1010
    %vm1012 = vcmp.lt.s32.totalorder %v993, 1
    %vm1013 = vcmp.lt.s32.totalorder %v993, 2
    %vm1014 = vcmp.lt.s32.totalorder %v993, 3
    %vm1015 = vcmp.lt.s32.totalorder %v993, 4
    %v1016 = vsel %vm1012, %v996, %v999
    %v1017 = vsel %vm1015, %v1005, 2102212464
    %v1018 = vsel %vm1014, %v1002, %v1017
    %v1019 = vsel %vm1013, %v1016, %v1018
    %v1020 = vsel %vm1012, %v999, %v1002
    %v1021 = vsel %vm1015, %v1008, 920167782
    %v1022 = vsel %vm1014, %v1005, %v1021
    %v1023 = vsel %vm1013, %v1020, %v1022
    %v1024 = vsel %vm1012, %v1002, %v1005
    %v1025 = vsel %vm1015, %v1011, 1326507024
    %v1026 = vsel %vm1014, %v1008, %v1025
    %v1027 = vsel %vm1013, %v1024, %v1026
    %v1028 = vshll.u32 %v988, 8
    %v1029 = vand.u32 %v1028, 65535
    %v1030 = vshrl.u32 %v1028, 16
    %v1031 = vand.u32 %v1027, 65535
    %v1032 = vshrl.u32 %v1027, 16
    %v1033 = vmul.u32 %v1029, %v1031
    %v1034 = vmul.u32 %v1029, %v1032
    %v1035 = vmul.u32 %v1030, %v1031
    %v1036 = vmul.u32 %v1030, %v1032
    %v1037 = vshll.u32 %v1034, 16
    %v1038 = vshrl.u32 %v1034, 16
    %v1039 = vshll.u32 %v1035, 16
    %v1040 = vshrl.u32 %v1035, 16
    %vm1041 = vc.u32 %v1033, %v1037
    %v1042 = vsel %vm1041, 1, 0
    %v1043 = vadd.s32 %v1033, %v1037
    %v1044 = vadd.s32 %v1036, %v1042
    %vm1045 = vc.u32 %v1043, %v1039
    %v1046 = vsel %vm1045, 1, 0
    %v1047 = vadd.s32 %v1043, %v1039
    %v1048 = vadd.s32 %v1044, %v1046
    %v1049 = vadd.s32 %v1048, %v1038
    %v1050 = vadd.s32 %v1049, %v1040
    %v1051 = vand.u32 %v1028, 65535
    %v1052 = vshrl.u32 %v1028, 16
    %v1053 = vand.u32 %v1023, 65535
    %v1054 = vshrl.u32 %v1023, 16
    %v1055 = vmul.u32 %v1051, %v1053
    %v1056 = vmul.u32 %v1051, %v1054
    %v1057 = vmul.u32 %v1052, %v1053
    %v1058 = vmul.u32 %v1052, %v1054
    %v1059 = vshll.u32 %v1056, 16
    %v1060 = vshrl.u32 %v1056, 16
    %v1061 = vshll.u32 %v1057, 16
    %v1062 = vshrl.u32 %v1057, 16
    %vm1063 = vc.u32 %v1055, %v1059
    %v1064 = vsel %vm1063, 1, 0
    %v1065 = vadd.s32 %v1055, %v1059
    %v1066 = vadd.s32 %v1058, %v1064
    %vm1067 = vc.u32 %v1065, %v1061
    %v1068 = vsel %vm1067, 1, 0
    %v1069 = vadd.s32 %v1065, %v1061
    %v1070 = vadd.s32 %v1066, %v1068
    %v1071 = vadd.s32 %v1070, %v1060
    %v1072 = vadd.s32 %v1071, %v1062
    %v1073 = vmul.u32 %v1028, %v1019
    %v1074 = vadd.s32 %v1050, %v1069
    %vm1075 = vc.u32 %v1050, %v1069
    %v1076 = vadd.s32 %v1072, 1
    %v1077 = vsel %vm1075, %v1076, %v1072
    %v1078 = vadd.s32 %v1073, %v1077
    %v1079 = vadd.s32 %v1078, 536870912
    %v1080 = vshrl.u32 %v1079, 30
    %v1081 = vshll.u32 %v1080, 30
    %v1082 = vsub.s32 %v1078, %v1081
    %vm1083 = vcmp.lt.s32.totalorder %v1082, 0
    %v1084 = vsub.s32 0, %v1082
    %v1085 = vsel %vm1083, %v1084, %v1082
    %v1086 = vclz %v1085
    %v1087 = vsub.s32 %v1086, 2
    %vm1088 = vcmp.gt.s32.totalorder 0, %v1087
    %v1089 = vsel %vm1088, 0, %v1087
    %v1090 = vsub.s32 32, %v1089
    %v1091 = vshll.u32 %v1082, %v1089
    %v1092 = vshrl.u32 %v1074, %v1090
    %v1093 = vor.u32 %v1091, %v1092
    %v1094 = vsub.s32 4294967266, %v1089
    %v1095 = vadd.s32 %v1094, 127
    %v1096 = vshll.u32 %v1095, 23
    %v1097 = vor.u32 4788187, %v1096
    %v1098 = vand.u32 2147483647, %v1097
    %v1100 = vcvt.s32.f32 %v1093
    %v1101 = vmul.f32 %v1100, %v1098
    %v1102 = vxor.u32 %v1101, 2147483648
    %v1103 = vsel %vm982, %v1102, %v1101
    %v1104 = vsub.s32 4, %v1080
    %v1105 = vsel %vm982, %v1104, %v1080
    %v1106 = vsel %vm981, %v46, %v1103
    %v1107 = vsel %vm981, 0, %v1105
    %v1108 = vmul.f32 %v1106, %v1106
    %v1109 = vmul.f32 %v1108, -0.001358992
    %v1110 = vadd.f32 %v1109, 0.041655596
    %v1111 = vmul.f32 %v1108, %v1110
    %v1112 = vadd.f32 %v1111, -0.4999988
    %v1113 = vmul.f32 %v1108, %v1112
    %v1114 = vadd.f32 1.0, %v1113
    %v1115 = vmul.f32 %v1106, %v1106
    %v1116 = vmul.f32 %v1115, -0.00019511016
    %v1117 = vadd.f32 %v1116, 0.008332121
    %v1118 = vmul.f32 %v1115, %v1117
    %v1119 = vadd.f32 %v1118, -0.16666654
    %v1120 = vmul.f32 %v1115, %v1119
    %v1121 = vadd.f32 %v1120, 1.0
    %v1122 = vmul.f32 %v1121, %v1106
    %vm1123 = vweird.f32 %v46
    %v1124 = vand.u32 %v1107, 3
    %vm1125 = vcmp.lt.s32.totalorder %v1124, 2
    %vm1126 = vcmp.eq.s32.totalorder %v1124, 0
    %v1127 = vxor.u32 %v1122, 2147483648
    %v1128 = vsel %vm1126, %v1114, %v1127
    %vm1129 = vcmp.eq.s32.totalorder %v1124, 2
    %v1130 = vxor.u32 %v1114, 2147483648
    %v1131 = vsel %vm1129, %v1130, %v1122
    %v1132 = vsel %vm1125, %v1128, %v1131
    %v1133 = vsel %vm1123, nan, %v1132
    %v1134 = vand.u32 2147483647, %v47
    %vm1135 = vcmp.le.f32.partialorder %v1134, 0.7853982
    %vm1136 = vcmp.lt.s32.totalorder %v47, 0
    %v1137 = vand.u32 %v47, 2139095040
    %v1138 = vshrl.u32 %v1137, 23
    %v1139 = vsub.s32 %v1138, 127
    %v1140 = vand.u32 2147483647, %v47
    %v1141 = vand.u32 %v1140, 8388607
    %v1142 = vor.u32 %v1141, 8388608
    %v1143 = vsub.s32 0, %v1142
    %v1144 = vadd.s32 %v1139, 1
    %vm1145 = vcmp.gt.s32.totalorder %v1144, 0
    %v1146 = vsel %vm1145, %v1144, 0
    %v1147 = vshrl.u32 %v1146, 5
    %v1148 = vand.u32 %v1146, 31
    %v1149 = vsub.s32 32, %v1148
    %v1150 = vshrl.u32 683565275, %v1149
    %v1151 = vshll.u32 683565275, %v1148
    %v1152 = vshrl.u32 2475754826, %v1149
    %v1153 = vor.u32 %v1151, %v1152
    %v1154 = vshll.u32 2475754826, %v1148
    %v1155 = vshrl.u32 2131351028, %v1149
    %v1156 = vor.u32 %v1154, %v1155
    %v1157 = vshll.u32 2131351028, %v1148
    %v1158 = vshrl.u32 2102212464, %v1149
    %v1159 = vor.u32 %v1157, %v1158
    %v1160 = vshll.u32 2102212464, %v1148
    %v1161 = vshrl.u32 920167782, %v1149
    %v1162 = vor.u32 %v1160, %v1161
    %v1163 = vshll.u32 920167782, %v1148
    %v1164 = vshrl.u32 1326507024, %v1149
    %v1165 = vor.u32 %v1163, %v1164
    %vm1166 = vcmp.lt.s32.totalorder %v1147, 1
    %vm1167 = vcmp.lt.s32.totalorder %v1147, 2
    %vm1168 = vcmp.lt.s32.totalorder %v1147, 3
    %vm1169 = vcmp.lt.s32.totalorder %v1147, 4
    %v1170 = vsel %vm1166, %v1150, %v1153
    %v1171 = vsel %vm1169, %v1159, 2102212464
    %v1172 = vsel %vm1168, %v1156, %v1171
    %v1173 = vsel %vm1167, %v1170, %v1172
    %v1174 = vsel %vm1166, %v1153, %v1156
    %v1175 = vsel %vm1169, %v1162, 920167782
    %v1176 = vsel %vm1168, %v1159, %v1175
    %v1177 = vsel %vm1167, %v1174, %v1176
    %v1178 = vsel %vm1166, %v1156, %v1159
    %v1179 = vsel %vm1169, %v1165, 1326507024
    %v1180 = vsel %vm1168, %v1162, %v1179
    %v1181 = vsel %vm1167, %v1178, %v1180
    %v1182 = vshll.u32 %v1142, 8
    %v1183 = vand.u32 %v1182, 65535
    %v1184 = vshrl.u32 %v1182, 16
    %v1185 = vand.u32 %v1181, 65535
    %v1186 = vshrl.u32 %v1181, 16
    %v1187 = vmul.u32 %v1183, %v1185
    %v1188 = vmul.u32 %v1183, %v1186
    %v1189 = vmul.u32 %v1184, %v1185
    %v1190 = vmul.u32 %v1184, %v1186
    %v1191 = vshll.u32 %v1188, 16
    %v1192 = vshrl.u32 %v1188, 16
    %v1193 = vshll.u32 %v1189, 16
    %v1194 = vshrl.u32 %v1189, 16
    %vm1195 = vc.u32 %v1187, %v1191
    %v1196 = vsel %vm1195, 1, 0
    %v1197 = vadd.s32 %v1187, %v1191
    %v1198 = vadd.s32 %v1190, %v1196
    %vm1199 = vc.u32 %v1197, %v1193
    %v1200 = vsel %vm1199, 1, 0
    %v1201 = vadd.s32 %v1197, %v1193
    %v1202 = vadd.s32 %v1198, %v1200
    %v1203 = vadd.s32 %v1202, %v1192
    %v1204 = vadd.s32 %v1203, %v1194
    %v1205 = vand.u32 %v1182, 65535
    %v1206 = vshrl.u32 %v1182, 16
    %v1207 = vand.u32 %v1177, 65535
    %v1208 = vshrl.u32 %v1177, 16
    %v1209 = vmul.u32 %v1205, %v1207
    %v1210 = vmul.u32 %v1205, %v1208
    %v1211 = vmul.u32 %v1206, %v1207
    %v1212 = vmul.u32 %v1206, %v1208
    %v1213 = vshll.u32 %v1210, 16
    %v1214 = vshrl.u32 %v1210, 16
    %v1215 = vshll.u32 %v1211, 16
    %v1216 = vshrl.u32 %v1211, 16
    %vm1217 = vc.u32 %v1209, %v1213
    %v1218 = vsel %vm1217, 1, 0
    %v1219 = vadd.s32 %v1209, %v1213
    %v1220 = vadd.s32 %v1212, %v1218
    %vm1221 = vc.u32 %v1219, %v1215
    %v1222 = vsel %vm1221, 1, 0
    %v1223 = vadd.s32 %v1219, %v1215
    %v1224 = vadd.s32 %v1220, %v1222
    %v1225 = vadd.s32 %v1224, %v1214
    %v1226 = vadd.s32 %v1225, %v1216
    %v1227 = vmul.u32 %v1182, %v1173
    %v1228 = vadd.s32 %v1204, %v1223
    %vm1229 = vc.u32 %v1204, %v1223
    %v1230 = vadd.s32 %v1226, 1
    %v1231 = vsel %vm1229, %v1230, %v1226
    %v1232 = vadd.s32 %v1227, %v1231
    %v1233 = vadd.s32 %v1232, 536870912
    %v1234 = vshrl.u32 %v1233, 30
    %v1235 = vshll.u32 %v1234, 30
    %v1236 = vsub.s32 %v1232, %v1235
    %vm1237 = vcmp.lt.s32.totalorder %v1236, 0
    %v1238 = vsub.s32 0, %v1236
    %v1239 = vsel %vm1237, %v1238, %v1236
    %v1240 = vclz %v1239
    %v1241 = vsub.s32 %v1240, 2
    %vm1242 = vcmp.gt.s32.totalorder 0, %v1241
    %v1243 = vsel %vm1242, 0, %v1241
    %v1244 = vsub.s32 32, %v1243
    %v1245 = vshll.u32 %v1236, %v1243
    %v1246 = vshrl.u32 %v1228, %v1244
    %v1247 = vor.u32 %v1245, %v1246
    %v1248 = vsub.s32 4294967266, %v1243
    %v1249 = vadd.s32 %v1248, 127
    %v1250 = vshll.u32 %v1249, 23
    %v1251 = vor.u32 4788187, %v1250
    %v1252 = vand.u32 2147483647, %v1251
    %v1254 = vcvt.s32.f32 %v1247
    %v1255 = vmul.f32 %v1254, %v1252
    %v1256 = vxor.u32 %v1255, 2147483648
    %v1257 = vsel %vm1136, %v1256, %v1255
    %v1258 = vsub.s32 4, %v1234
    %v1259 = vsel %vm1136, %v1258, %v1234
    %v1260 = vsel %vm1135, %v47, %v1257
    %v1261 = vsel %vm1135, 0, %v1259
    %v1262 = vmul.f32 %v1260, %v1260
    %v1263 = vmul.f32 %v1262, -0.001358992
    %v1264 = vadd.f32 %v1263, 0.041655596
    %v1265 = vmul.f32 %v1262, %v1264
    %v1266 = vadd.f32 %v1265, -0.4999988
    %v1267 = vmul.f32 %v1262, %v1266
    %v1268 = vadd.f32 1.0, %v1267
    %v1269 = vmul.f32 %v1260, %v1260
    %v1270 = vmul.f32 %v1269, -0.00019511016
    %v1271 = vadd.f32 %v1270, 0.008332121
    %v1272 = vmul.f32 %v1269, %v1271
    %v1273 = vadd.f32 %v1272, -0.16666654
    %v1274 = vmul.f32 %v1269, %v1273
    %v1275 = vadd.f32 %v1274, 1.0
    %v1276 = vmul.f32 %v1275, %v1260
    %vm1277 = vweird.f32 %v47
    %v1278 = vand.u32 %v1261, 3
    %vm1279 = vcmp.lt.s32.totalorder %v1278, 2
    %vm1280 = vcmp.eq.s32.totalorder %v1278, 0
    %v1281 = vxor.u32 %v1276, 2147483648
    %v1282 = vsel %vm1280, %v1268, %v1281
    %vm1283 = vcmp.eq.s32.totalorder %v1278, 2
    %v1284 = vxor.u32 %v1268, 2147483648
    %v1285 = vsel %vm1283, %v1284, %v1276
    %v1286 = vsel %vm1279, %v1282, %v1285
    %v1287 = vsel %vm1277, nan, %v1286
    %s1288 = scalar_lea.vmem [#allocation2], 32
    %1289 = vst [vmem:[%s1288] sm:$0xff] %v825
    %1290 = vst [vmem:[%s1288 + $0x8] sm:$0xff] %v979
    %1291 = vst [vmem:[%s1288 + $0x10] sm:$0xff] %v1133
    %1292 = vst [vmem:[%s1288 + $0x18] sm:$0xff] %v1287
    // Predicated region
    $region10: #{tpu_custom_call.1} parent=1 // pred_check
      _
    $region11: #{tpu_custom_call.1} parent=1 // pred_check_branch
      %1294 = sbr.rel (0) target = $region13
    $region12: #{tpu_custom_call.1} parent=1 // pred_region
      %1296 = vsyncadd [#allocation3], 0
      %s1297 = sshll.u32 [#allocation2], 4
      %s1298 = int_to_ptr.vmem [resolvable:$true] %s1297
      %s1299 = sshll.u32 %s2, 4
      %s1300 = int_to_ptr.hbm [resolvable:$true] %s1299
      %1305 = dma.vmem_to_hbm [thread:$0]  %s1298, 1024, %s1300, [#allocation3], 128, 128, 8
    $region13: #{tpu_custom_call.1} parent=1 // pred_fallthru
      _
    // Predicated region
    $region14: #{tpu_custom_call.1} parent=1 // pred_check
      _
    $region15: #{tpu_custom_call.1} parent=1 // pred_check_branch
      %1307 = sbr.rel (0) target = $region17
    $region16: #{tpu_custom_call.1} parent=1 // pred_region
      %1309 = dma.done [#allocation3], 1024
    $region17: #{tpu_custom_call.1} parent=1 // pred_fallthru
      _
    %1310 = vsyncpa [#allocation3], 1

</llo_original>
